<compile_context>
chip_gen: v7x
topology: tpu7x:2x2x1
jax: 0.10.0
libtpu: 0.0.40
codegen_flags: <defaults>
</compile_context>

<pallas_src>
import jax
import jax.numpy as jnp
from jax import lax
from jax.experimental import pallas as pl
from jax.experimental.pallas import tpu as pltpu


def _leaky(x, slope=0.01):
    return jnp.where(x >= 0, x, slope * x)


# ------------------------------------------------------------------
# Fused kernel: Hypergraph(pos) + Hypergraph(neg) + AvgReadout + Sigmoid
#               + Bilinear discriminator + time-mean
# ------------------------------------------------------------------
def _fused_kernel(ep_ref, en_ref, adj_ref, mavg_ref, exp_ref, tavg_ref,
                  w_ref, b_ref, hp_ref, lg_ref):
    D = hp_ref.shape[1]
    ep = ep_ref[0]                         # (D, T*N)   positive sample
    en = en_ref[0]                         # (D, T*N)   negative sample
    adj_bd = adj_ref[...]                  # (T*H, T*N) block-diagonal adjacency

    # ---- Hypergraph on pos+neg stacked (M = 2D rows, single lane-dense matmuls) ----
    x = jnp.concatenate([ep, en], axis=0)  # (2D, T*N)
    # hyper[m, t*H+h] = sum_n x[m, t*N+n] * adj[t,h,n]  (contract on adj's LAST axis)
    hyper = lax.dot_general(x, adj_bd, (((1,), (1,)), ((), ())),
                            preferred_element_type=jnp.float32)        # (2D, T*H)
    hyper = _leaky(hyper)
    # ret[m, t*N+n] = sum_h hyper[m, t*H+h] * adj[t,h,n]
    ret = jnp.dot(hyper, adj_bd, preferred_element_type=jnp.float32)   # (2D, T*N)
    ret = _leaky(ret)

    hp = ret[:D, :]                        # (D, T*N)  positive  (sublane-aligned slice)
    hn = ret[D:, :]                        # (D, T*N)  negative
    hp_ref[0] = hp.astype(hp_ref.dtype)    # single full-lane (D,128) store

    # ---- AvgReadout + sigmoid: area-mean via MXU against constant matrix ----
    score = jax.nn.sigmoid(
        jnp.dot(hp, mavg_ref[...], preferred_element_type=jnp.float32))  # (D, T*C)

    # ---- Bilinear discriminator + time-mean (all lane-dense) ----
    y = jnp.dot(w_ref[...], score, preferred_element_type=jnp.float32)    # (D, T*C)
    y_exp = jnp.dot(y, exp_ref[...], preferred_element_type=jnp.float32)  # (D, T*N)

    zp = jnp.dot(hp * y_exp, tavg_ref[...], preferred_element_type=jnp.float32)  # (D, N)
    zn = jnp.dot(hn * y_exp, tavg_ref[...], preferred_element_type=jnp.float32)  # (D, N)
    bias = b_ref[0, 0]
    lp = jnp.sum(zp, axis=0, keepdims=True) + bias                        # (1, N)
    ln = jnp.sum(zn, axis=0, keepdims=True) + bias                        # (1, N)
    lg_ref[0] = jnp.concatenate([lp, ln], axis=0)                         # (2, N)


# ------------------------------------------------------------------
# Full Hypergraph_Infomax forward
# ------------------------------------------------------------------
def hypergraph_infomax(eb_pos, eb_neg, adj, W, bias):
    B, D, A, T, C = eb_pos.shape
    Tt, H, N = adj.shape
    assert Tt == T and N == A * C
    TN, TH, TC = T * N, T * H, T * C
    f32 = jnp.float32

    # glue: PyTorch's embeds.transpose(2,3).view(B, D, T, A*C), flattened lane-dense
    ep = jnp.swapaxes(eb_pos, 2, 3).reshape(B, D, TN)
    en = jnp.swapaxes(eb_neg, 2, 3).reshape(B, D, TN)

    # block-diagonal adjacency: adj_bd[t*H+h, s*N+n] = adj[t,h,n] * [t==s]
    eye_t = jnp.eye(T, dtype=f32)
    adj_bd = (adj.astype(f32)[:, :, None, :] * eye_t[:, None, :, None]).reshape(TH, TN)

    # constant reduction / broadcast matrices (MXU-friendly replacements for the
    # area-mean, the expand-over-area and the time-mean)
    eye_c = jnp.eye(C, dtype=f32)
    mavg = (eye_t[:, None, None, :, None] * eye_c[None, None, :, None, :]) / A
    mavg = jnp.broadcast_to(mavg, (T, A, C, T, C)).reshape(TN, TC)        # (T*N, T*C)
    expand = jnp.transpose(mavg) * A                                      # (T*C, T*N)
    tavg = jnp.broadcast_to(jnp.eye(N, dtype=f32)[None], (T, N, N)).reshape(TN, N) / T

    bias2 = jnp.asarray(bias, f32).reshape(1, 1)

    hp_flat, lg = pl.pallas_call(
        _fused_kernel,
        out_shape=(jax.ShapeDtypeStruct((B, D, TN), eb_pos.dtype),
                   jax.ShapeDtypeStruct((B, 2, N), f32)),
        grid_spec=pltpu.PrefetchScalarGridSpec(
            num_scalar_prefetch=0,
            grid=(B,),
            in_specs=[
                pl.BlockSpec((1, D, TN), lambda b: (b, 0, 0)),
                pl.BlockSpec((1, D, TN), lambda b: (b, 0, 0)),
                pl.BlockSpec((TH, TN), lambda b: (0, 0)),
                pl.BlockSpec((TN, TC), lambda b: (0, 0)),
                pl.BlockSpec((TC, TN), lambda b: (0, 0)),
                pl.BlockSpec((TN, N), lambda b: (0, 0)),
                pl.BlockSpec((D, D), lambda b: (0, 0)),
                pl.BlockSpec((1, 1), lambda b: (0, 0),
                             memory_space=pltpu.MemorySpace.SMEM),
            ],
            out_specs=[
                pl.BlockSpec((1, D, TN), lambda b: (b, 0, 0)),
                pl.BlockSpec((1, 2, N), lambda b: (b, 0, 0)),
            ],
        ),
        compiler_params=pltpu.CompilerParams(
            dimension_semantics=("parallel",),        # v7x: shard batch over 2 TCs
            vmem_limit_bytes=32 * 1024 * 1024,        # safe headroom on v7x's 64 MiB
        ),
    )(ep, en, adj_bd, mavg, expand, tavg, W, bias2)

    # glue back to the PyTorch layouts
    h_pos = jnp.swapaxes(hp_flat.reshape(B, D, T, A, C), 2, 3)            # (B, D, A, T, C)
    logits = jnp.transpose(lg.reshape(B, 2, A, C), (0, 3, 1, 2)).reshape(B, C, 2 * A)
    return h_pos, logits


# ------------------------------------------------------------------
# Pure-JAX reference (mirrors the PyTorch forward) for a correctness check
# ------------------------------------------------------------------
def reference(eb_pos, eb_neg, adj, W, bias):
    def hyper(eb):
        B, D, A, T, C = eb.shape
        ec = jnp.swapaxes(eb, 2, 3).reshape(B, D, T, A * C)
        he = _leaky(jnp.einsum('thn,bdtn->bdth', adj, ec))
        re = _leaky(jnp.einsum('thn,bdth->bdtn', adj, he))
        return jnp.swapaxes(re.reshape(B, D, T, A, C), 2, 3)

    h_pos = hyper(eb_pos)
    h_neg = hyper(eb_neg)
    score = jax.nn.sigmoid(jnp.mean(h_pos, axis=2))              # (B, D, T, C)
    y = jnp.einsum('ij,bjtc->bitc', W, score)
    sc_pos = jnp.einsum('biatc,bitc->bcat', h_pos, y) + bias[0, 0]
    sc_neg = jnp.einsum('biatc,bitc->bcat', h_neg, y) + bias[0, 0]
    logits = jnp.concatenate([sc_pos.mean(-1), sc_neg.mean(-1)], axis=2)
    return h_pos, logits


if __name__ == "__main__":
    # small shapes: batch=2, latdim=8, areaNum=8, temporalRange=4, cateNum=4, hyperNum=16
    B, D, A, T, C, H = 2, 8, 8, 4, 4, 16
    N = A * C

    key = jax.random.PRNGKey(0)
    k1, k2, k3, k4 = jax.random.split(key, 4)
    eb_pos = jax.random.normal(k1, (B, D, A, T, C), jnp.float32)
    eb_neg = jax.random.normal(k2, (B, D, A, T, C), jnp.float32)

    # parameters (deterministic, synthetic)
    adj = jax.random.normal(k3, (T, H, N), jnp.float32)          # Hypergraph.adj ~ randn
    # xavier_uniform bound for nn.Bilinear weight of shape (1, D, D)
    bound = (6.0 / (D * D + D)) ** 0.5
    W = jax.random.uniform(k4, (D, D), jnp.float32, -bound, bound)
    # PyTorch init sets the bilinear bias to 0.0; use a nonzero value here to
    # exercise the bias path of the kernel (forward works for any bias value).
    bias = jnp.full((1, 1), 0.1, jnp.float32)

    h_pos, logits = hypergraph_infomax(eb_pos, eb_neg, adj, W, bias)
    jax.block_until_ready((h_pos, logits))

    h_ref, l_ref = reference(eb_pos, eb_neg, adj, W, bias)
    assert h_pos.shape == (B, D, A, T, C)
    assert logits.shape == (B, C, 2 * A)
    assert jnp.allclose(h_pos, h_ref, atol=1e-4, rtol=1e-4)
    assert jnp.allclose(logits, l_ref, atol=1e-4, rtol=1e-4)

    print("KERNEL_OK")
</pallas_src>

<mosaic_0001>
module attributes {stable_mosaic.version = 11 : i64} {
  func.func @_fused_kernel(%arg0: i32, %arg1: memref<1x8x128xf32, #tpu.memory_space<vmem>>, %arg2: memref<1x8x128xf32, #tpu.memory_space<vmem>>, %arg3: memref<64x128xf32, #tpu.memory_space<vmem>>, %arg4: memref<128x16xf32, #tpu.memory_space<vmem>>, %arg5: memref<16x128xf32, #tpu.memory_space<vmem>>, %arg6: memref<128x32xf32, #tpu.memory_space<vmem>>, %arg7: memref<8x8xf32, #tpu.memory_space<vmem>>, %arg8: memref<1x1xf32, #tpu.memory_space<smem>>, %arg9: memref<1x8x128xf32, #tpu.memory_space<vmem>>, %arg10: memref<1x2x32xf32, #tpu.memory_space<vmem>>) attributes {dimension_semantics = [#tpu.dimension_semantics<parallel>], iteration_bounds = array<i64: 2>, scalar_prefetch = 0 : i64, scratch_operands = 0 : i64, tpu.core_type = #tpu.core_type<tc>, window_params = [{transform_indices = @transform_0, window_bounds = array<i64: 1, 8, 128>}, {transform_indices = @transform_1, window_bounds = array<i64: 1, 8, 128>}, {pipeline_mode = #tpu.pipeline_mode<synchronous>, transform_indices = @transform_2, window_bounds = array<i64: 64, 128>}, {pipeline_mode = #tpu.pipeline_mode<synchronous>, transform_indices = @transform_3, window_bounds = array<i64: 128, 16>}, {pipeline_mode = #tpu.pipeline_mode<synchronous>, transform_indices = @transform_4, window_bounds = array<i64: 16, 128>}, {pipeline_mode = #tpu.pipeline_mode<synchronous>, transform_indices = @transform_5, window_bounds = array<i64: 128, 32>}, {pipeline_mode = #tpu.pipeline_mode<synchronous>, transform_indices = @transform_6, window_bounds = array<i64: 8, 8>}, {transform_indices = @transform_7, window_bounds = array<i64: 1, 1>}, {transform_indices = @transform_8, window_bounds = array<i64: 1, 8, 128>}, {transform_indices = @transform_9, window_bounds = array<i64: 1, 2, 32>}]} {
    %c0 = arith.constant 0 : index
    %c0_0 = arith.constant 0 : index
    %c0_1 = arith.constant 0 : index
    %0 = vector.load %arg1[%c0, %c0_0, %c0_1] : memref<1x8x128xf32, #tpu.memory_space<vmem>>, vector<1x8x128xf32>
    %1 = vector.shape_cast %0 : vector<1x8x128xf32> to vector<8x128xf32>
    %c0_2 = arith.constant 0 : index
    %c0_3 = arith.constant 0 : index
    %c0_4 = arith.constant 0 : index
    %2 = vector.load %arg2[%c0_2, %c0_3, %c0_4] : memref<1x8x128xf32, #tpu.memory_space<vmem>>, vector<1x8x128xf32>
    %3 = vector.shape_cast %2 : vector<1x8x128xf32> to vector<8x128xf32>
    %c0_5 = arith.constant 0 : index
    %c0_6 = arith.constant 0 : index
    %4 = vector.load %arg3[%c0_5, %c0_6] : memref<64x128xf32, #tpu.memory_space<vmem>>, vector<64x128xf32>
    %5 = tpu.concatenate %1, %3 in 0 : vector<8x128xf32>, vector<8x128xf32> -> vector<16x128xf32>
    %cst = arith.constant dense<0.000000e+00> : vector<16x64xf32>
    %6 = tpu.matmul %5, %4, %cst {dimension_numbers = #tpu.dot_dimension_numbers<[1], [1], [0], [0], [0, 0, 1, 0], [], []>} : vector<16x128xf32>, vector<64x128xf32>, vector<16x64xf32> -> vector<16x64xf32>
    %cst_7 = arith.constant 0.000000e+00 : f32
    %7 = vector.broadcast %cst_7 : f32 to vector<16x64xf32>
    %8 = arith.cmpf oge, %6, %7 : vector<16x64xf32>
    %cst_8 = arith.constant 0.00999999977 : f32
    %9 = vector.broadcast %cst_8 : f32 to vector<16x64xf32>
    %10 = arith.mulf %9, %6 : vector<16x64xf32>
    %11 = arith.select %8, %6, %10 : vector<16x64xi1>, vector<16x64xf32>
    %cst_9 = arith.constant dense<0.000000e+00> : vector<16x128xf32>
    %12 = tpu.matmul %11, %4, %cst_9 {dimension_numbers = #tpu.dot_dimension_numbers<[1], [0], [0], [1], [0, 0, 1, 1], [], []>} : vector<16x64xf32>, vector<64x128xf32>, vector<16x128xf32> -> vector<16x128xf32>
    %cst_10 = arith.constant 0.000000e+00 : f32
    %13 = vector.broadcast %cst_10 : f32 to vector<16x128xf32>
    %14 = arith.cmpf oge, %12, %13 : vector<16x128xf32>
    %cst_11 = arith.constant 0.00999999977 : f32
    %15 = vector.broadcast %cst_11 : f32 to vector<16x128xf32>
    %16 = arith.mulf %15, %12 : vector<16x128xf32>
    %17 = arith.select %14, %12, %16 : vector<16x128xi1>, vector<16x128xf32>
    %18 = vector.extract_strided_slice %17 {offsets = [0, 0], sizes = [8, 128], strides = [1, 1]} : vector<16x128xf32> to vector<8x128xf32>
    %19 = vector.extract_strided_slice %17 {offsets = [8, 0], sizes = [8, 128], strides = [1, 1]} : vector<16x128xf32> to vector<8x128xf32>
    %c0_12 = arith.constant 0 : index
    %c0_13 = arith.constant 0 : index
    %c0_14 = arith.constant 0 : index
    %20 = vector.load %arg9[%c0_12, %c0_13, %c0_14] : memref<1x8x128xf32, #tpu.memory_space<vmem>>, vector<1x8x128xf32>
    %21 = vector.shape_cast %20 : vector<1x8x128xf32> to vector<8x128xf32>
    %22 = vector.shape_cast %18 : vector<8x128xf32> to vector<1x8x128xf32>
    tpu.vector_store %arg9[%c0_12, %c0_13, %c0_14], %22 {strides = array<i32>} : memref<1x8x128xf32, #tpu.memory_space<vmem>>, vector<1x8x128xf32>,
    %c0_15 = arith.constant 0 : index
    %c0_16 = arith.constant 0 : index
    %23 = vector.load %arg4[%c0_15, %c0_16] : memref<128x16xf32, #tpu.memory_space<vmem>>, vector<128x16xf32>
    %cst_17 = arith.constant dense<0.000000e+00> : vector<8x16xf32>
    %24 = tpu.matmul %18, %23, %cst_17 {dimension_numbers = #tpu.dot_dimension_numbers<[1], [0], [0], [1], [0, 0, 1, 1], [], []>} : vector<8x128xf32>, vector<128x16xf32>, vector<8x16xf32> -> vector<8x16xf32>
    %25 = arith.negf %24 : vector<8x16xf32>
    %26 = math.exp %25 : vector<8x16xf32>
    %cst_18 = arith.constant 1.000000e+00 : f32
    %27 = vector.broadcast %cst_18 : f32 to vector<8x16xf32>
    %28 = arith.addf %27, %26 : vector<8x16xf32>
    %29 = arith.divf %27, %28 : vector<8x16xf32>
    %c0_19 = arith.constant 0 : index
    %c0_20 = arith.constant 0 : index
    %30 = vector.load %arg7[%c0_19, %c0_20] : memref<8x8xf32, #tpu.memory_space<vmem>>, vector<8x8xf32>
    %cst_21 = arith.constant dense<0.000000e+00> : vector<8x16xf32>
    %31 = tpu.matmul %30, %29, %cst_21 {dimension_numbers = #tpu.dot_dimension_numbers<[1], [0], [0], [1], [0, 0, 1, 1], [], []>} : vector<8x8xf32>, vector<8x16xf32>, vector<8x16xf32> -> vector<8x16xf32>
    %c0_22 = arith.constant 0 : index
    %c0_23 = arith.constant 0 : index
    %32 = vector.load %arg5[%c0_22, %c0_23] : memref<16x128xf32, #tpu.memory_space<vmem>>, vector<16x128xf32>
    %cst_24 = arith.constant dense<0.000000e+00> : vector<8x128xf32>
    %33 = tpu.matmul %31, %32, %cst_24 {dimension_numbers = #tpu.dot_dimension_numbers<[1], [0], [0], [1], [0, 0, 1, 1], [], []>} : vector<8x16xf32>, vector<16x128xf32>, vector<8x128xf32> -> vector<8x128xf32>
    %34 = arith.mulf %18, %33 : vector<8x128xf32>
    %c0_25 = arith.constant 0 : index
    %c0_26 = arith.constant 0 : index
    %35 = vector.load %arg6[%c0_25, %c0_26] : memref<128x32xf32, #tpu.memory_space<vmem>>, vector<128x32xf32>
    %cst_27 = arith.constant dense<0.000000e+00> : vector<8x32xf32>
    %36 = tpu.matmul %34, %35, %cst_27 {dimension_numbers = #tpu.dot_dimension_numbers<[1], [0], [0], [1], [0, 0, 1, 1], [], []>} : vector<8x128xf32>, vector<128x32xf32>, vector<8x32xf32> -> vector<8x32xf32>
    %37 = arith.mulf %19, %33 : vector<8x128xf32>
    %c0_28 = arith.constant 0 : index
    %c0_29 = arith.constant 0 : index
    %38 = vector.load %arg6[%c0_28, %c0_29] : memref<128x32xf32, #tpu.memory_space<vmem>>, vector<128x32xf32>
    %cst_30 = arith.constant dense<0.000000e+00> : vector<8x32xf32>
    %39 = tpu.matmul %37, %38, %cst_30 {dimension_numbers = #tpu.dot_dimension_numbers<[1], [0], [0], [1], [0, 0, 1, 1], [], []>} : vector<8x128xf32>, vector<128x32xf32>, vector<8x32xf32> -> vector<8x32xf32>
    %c0_31 = arith.constant 0 : index
    %c0_32 = arith.constant 0 : index
    %40 = memref.load %arg8[%c0_31, %c0_32] : memref<1x1xf32, #tpu.memory_space<smem>>
    %cst_33 = arith.constant dense<0.000000e+00> : vector<32xf32>
    %41 = vector.multi_reduction <add>, %36, %cst_33 [0] : vector<8x32xf32> to vector<32xf32>
    %42 = vector.shape_cast %41 : vector<32xf32> to vector<1x32xf32>
    %43 = vector.broadcast %40 : f32 to vector<1x32xf32>
    %44 = arith.addf %42, %43 : vector<1x32xf32>
    %cst_34 = arith.constant dense<0.000000e+00> : vector<32xf32>
    %45 = vector.multi_reduction <add>, %39, %cst_34 [0] : vector<8x32xf32> to vector<32xf32>
    %46 = vector.shape_cast %45 : vector<32xf32> to vector<1x32xf32>
    %47 = vector.broadcast %40 : f32 to vector<1x32xf32>
    %48 = arith.addf %46, %47 : vector<1x32xf32>
    %49 = tpu.concatenate %44, %48 in 0 : vector<1x32xf32>, vector<1x32xf32> -> vector<2x32xf32>
    %c0_35 = arith.constant 0 : index
    %c0_36 = arith.constant 0 : index
    %c0_37 = arith.constant 0 : index
    %50 = vector.load %arg10[%c0_35, %c0_36, %c0_37] : memref<1x2x32xf32, #tpu.memory_space<vmem>>, vector<1x2x32xf32>
    %51 = vector.shape_cast %50 : vector<1x2x32xf32> to vector<2x32xf32>
    %52 = vector.shape_cast %49 : vector<2x32xf32> to vector<1x2x32xf32>
    tpu.vector_store %arg10[%c0_35, %c0_36, %c0_37], %52 {strides = array<i32>} : memref<1x2x32xf32, #tpu.memory_space<vmem>>, vector<1x2x32xf32>,
    return
  }
  func.func @transform_0(%arg0: i32) -> (i32, i32, i32) {
    %c0_i32 = arith.constant 0 : i32
    %c0_i32_0 = arith.constant 0 : i32
    %c0_i32_1 = arith.constant 0 : i32
    return %arg0, %c0_i32, %c0_i32_0 : i32, i32, i32
  }
  func.func @transform_1(%arg0: i32) -> (i32, i32, i32) {
    %c0_i32 = arith.constant 0 : i32
    %c0_i32_0 = arith.constant 0 : i32
    %c0_i32_1 = arith.constant 0 : i32
    return %arg0, %c0_i32, %c0_i32_0 : i32, i32, i32
  }
  func.func @transform_2(%arg0: i32) -> (i32, i32) {
    %c0_i32 = arith.constant 0 : i32
    %c0_i32_0 = arith.constant 0 : i32
    %c0_i32_1 = arith.constant 0 : i32
    return %c0_i32, %c0_i32_0 : i32, i32
  }
  func.func @transform_3(%arg0: i32) -> (i32, i32) {
    %c0_i32 = arith.constant 0 : i32
    %c0_i32_0 = arith.constant 0 : i32
    %c0_i32_1 = arith.constant 0 : i32
    return %c0_i32, %c0_i32_0 : i32, i32
  }
  func.func @transform_4(%arg0: i32) -> (i32, i32) {
    %c0_i32 = arith.constant 0 : i32
    %c0_i32_0 = arith.constant 0 : i32
    %c0_i32_1 = arith.constant 0 : i32
    return %c0_i32, %c0_i32_0 : i32, i32
  }
  func.func @transform_5(%arg0: i32) -> (i32, i32) {
    %c0_i32 = arith.constant 0 : i32
    %c0_i32_0 = arith.constant 0 : i32
    %c0_i32_1 = arith.constant 0 : i32
    return %c0_i32, %c0_i32_0 : i32, i32
  }
  func.func @transform_6(%arg0: i32) -> (i32, i32) {
    %c0_i32 = arith.constant 0 : i32
    %c0_i32_0 = arith.constant 0 : i32
    %c0_i32_1 = arith.constant 0 : i32
    return %c0_i32, %c0_i32_0 : i32, i32
  }
  func.func @transform_7(%arg0: i32) -> (i32, i32) {
    %c0_i32 = arith.constant 0 : i32
    %c0_i32_0 = arith.constant 0 : i32
    %c0_i32_1 = arith.constant 0 : i32
    return %c0_i32, %c0_i32_0 : i32, i32
  }
  func.func @transform_8(%arg0: i32) -> (i32, i32, i32) {
    %c0_i32 = arith.constant 0 : i32
    %c0_i32_0 = arith.constant 0 : i32
    %c0_i32_1 = arith.constant 0 : i32
    return %arg0, %c0_i32, %c0_i32_0 : i32, i32, i32
  }
  func.func @transform_9(%arg0: i32) -> (i32, i32, i32) {
    %c0_i32 = arith.constant 0 : i32
    %c0_i32_0 = arith.constant 0 : i32
    %c0_i32_1 = arith.constant 0 : i32
    return %arg0, %c0_i32, %c0_i32_0 : i32, i32, i32
  }
}

</mosaic_0001>

<llo_original>
// kernel: tpu_custom_call.1
$region0: #{tpu_custom_call.1}
  #allocation0 [shape = 'u32[]', space=smem, size = 0x4, offset = 0x4, fixed_abs, tag = 'smem constant byte address 0x4 - core index']
  #allocation1 [shape = 'u32[144,128]{1,0:T(1,128)}', space=vmem, size = 0x12000, scoped, tag = 'internal scratch']
  #allocation2 [shape = 'f32[1,1]{1,0:T(1,128)S(6)}', space=smem, size = 0x200, scoped, tag = 'scoped memory for tpu_custom_call.1']
  %s0 = inlined_call_operand.vmem [shape: f32[2,8,128], index: 0, kind: input, shape index: {}]
  %s1 = inlined_call_operand.vmem [shape: f32[2,8,128], index: 1, kind: input, shape index: {}]
  %s2 = inlined_call_operand.vmem [shape: f32[64,128], index: 2, kind: input, shape index: {}]
  %s3 = inlined_call_operand.vmem [shape: f32[128,16], index: 3, kind: input, shape index: {}]
  %s4 = inlined_call_operand.vmem [shape: f32[16,128], index: 4, kind: input, shape index: {}]
  %s5 = inlined_call_operand.vmem [shape: f32[128,32], index: 5, kind: input, shape index: {}]
  %s6 = inlined_call_operand.vmem [shape: f32[8,8], index: 6, kind: input, shape index: {}]
  %s7 = inlined_call_operand.<no memory space> [shape: f32[1,1], index: 7, kind: input, shape index: {}]
  %s8 = inlined_call_operand.hbm [shape: f32[2,8,128], index: 8, kind: output, shape index: {0}]
  %s9 = inlined_call_operand.hbm [shape: f32[2,2,32], index: 9, kind: output, shape index: {1}]
  %10 = xla_tuple %s8, %s9
  %s11 = sld [smem:[#allocation0]]
  $region73: #{tpu_custom_call.1} parent=0
    _
  %s13 = ssub.s32 1, %s11
  %s14 = scalar_select 0, %s13, %s11
  %15 = sst [smem:[#allocation2]] %s7
  $region1: #{tpu_custom_call.1} parent=0
    #allocation3 [shape = 'u8[8192]{0}', space=vmem, size = 0x2000, scoped, tag = 'output window, operand 0']
    #allocation4 [shape = 's32[2]{0}', space=sflag, size = 0x8, scoped, tag = 'scoped memory for tpu_custom_call.1']
    #allocation5 [shape = 'u8[2048]{0}', space=vmem, size = 0x800, scoped, tag = 'output window, operand 1']
    #allocation6 [shape = 's32[2]{0}', space=sflag, size = 0x8, scoped, tag = 'scoped memory for tpu_custom_call.1']
    %16 = vsyncpa [#allocation4], 0
    %s17 = scalar_lea.sflag [#allocation4], 1
    %18 = vsyncpa %s17, 0
    %19 = vsyncpa [#allocation6], 0
    %s20 = scalar_lea.sflag [#allocation6], 1
    %21 = vsyncpa %s20, 0
    loop: start=0, step=1, limit=4
    $region2: #{tpu_custom_call.1} parent=1 // loop_pre_header
      _
    $region3: #{tpu_custom_call.1} parent=1 // loop_header
      %s23 = sphi 0, %s27
      %p24 = scmp.ge.s32.totalorder %s23, 4
      %s33 = sphi 0, %s35
      %s36 = sphi 0, %s33
      %s37 = sphi 0, %s36
      %s53 = sphi 0, %s37
      %s59 = sphi 0, %s61
      %s62 = sphi 0, %s59
      %s63 = sphi 0, %s62
      %s79 = sphi 0, %s63
      %s83 = sphi 0, %s83
      %s85 = sphi 0, %s83
      %s86 = sphi 0, %s85
      %s100 = sphi 0, %s86
      %s104 = sphi 0, %s104
      %s106 = sphi 0, %s104
      %s107 = sphi 0, %s106
      %s121 = sphi 0, %s107
      %s125 = sphi 0, %s125
      %s127 = sphi 0, %s125
      %s128 = sphi 0, %s127
      %s142 = sphi 0, %s128
      %s146 = sphi 0, %s146
      %s148 = sphi 0, %s146
      %s149 = sphi 0, %s148
      %s163 = sphi 0, %s149
      %s167 = sphi 0, %s167
      %s169 = sphi 0, %s167
      %s170 = sphi 0, %s169
      %s184 = sphi 0, %s170
      %s188 = sphi 0, %s188
      %s190 = sphi 0, %s188
      %s191 = sphi 0, %s190
      %s205 = sphi 0, %s191
      %s211 = sphi 0, %s213
      %s214 = sphi 0, %s211
      %s215 = sphi 0, %s214
      %s231 = sphi 0, %s215
      %s237 = sphi 0, %s239
      %s240 = sphi 0, %s237
      %s241 = sphi 0, %s240
      %s257 = sphi 0, %s241
    $region4: #{tpu_custom_call.1} parent=1 // loop_header_branch
      %26 = sbr.rel (%p24) target = $region8
    $region5: #{tpu_custom_call.1} parent=1 // loop_body
      %s28 = ssub.s32 %s23, 1
      %s29 = ssub.s32 %s23, 2
      %s30 = sadd.s32 %s23, 1
      %s31 = ssub.s32 %s23, %s30
      %p32 = scmp.eq.s32.totalorder %s31, 0
      %s34 = sadd.s32 %s33, 1
      %s35 = scalar_select %p32, %s33, %s34
      %p38 = pneg %p32
      %p39 = scmp.eq.s32.totalorder %s23, 1
      %p40 = por %p38, %p39
      %p41 = scmp.ne.s32.totalorder %s33, %s36
      %p42 = scmp.eq.s32.totalorder %s23, 0
      %p43 = por %p41, %p42
      %p44 = scmp.ne.s32.totalorder %s33, %s36
      %p45 = scmp.eq.s32.totalorder %s28, 1
      %p46 = por %p44, %p45
      %p47 = scmp.ne.s32.totalorder %s36, %s37
      %p48 = scmp.eq.s32.totalorder %s28, 0
      %p49 = por %p47, %p48
      %p50 = scmp.ne.s32.totalorder %s36, %s37
      %p51 = scmp.eq.s32.totalorder %s29, 1
      %p52 = por %p50, %p51
      %p54 = scmp.ne.s32.totalorder %s37, %s53
      %p55 = scmp.eq.s32.totalorder %s29, 0
      %p56 = por %p54, %p55
      %s57 = ssub.s32 %s23, %s30
      %p58 = scmp.eq.s32.totalorder %s57, 0
      %s60 = sadd.s32 %s59, 1
      %s61 = scalar_select %p58, %s59, %s60
      %p64 = pneg %p58
      %p65 = scmp.eq.s32.totalorder %s23, 1
      %p66 = por %p64, %p65
      %p67 = scmp.ne.s32.totalorder %s59, %s62
      %p68 = scmp.eq.s32.totalorder %s23, 0
      %p69 = por %p67, %p68
      %p70 = scmp.ne.s32.totalorder %s59, %s62
      %p71 = scmp.eq.s32.totalorder %s28, 1
      %p72 = por %p70, %p71
      %p73 = scmp.ne.s32.totalorder %s62, %s63
      %p74 = scmp.eq.s32.totalorder %s28, 0
      %p75 = por %p73, %p74
      %p76 = scmp.ne.s32.totalorder %s62, %s63
      %p77 = scmp.eq.s32.totalorder %s29, 1
      %p78 = por %p76, %p77
      %p80 = scmp.ne.s32.totalorder %s63, %s79
      %p81 = scmp.eq.s32.totalorder %s29, 0
      %p82 = por %p80, %p81
      %s84 = sadd.s32 %s83, 1
      %p87 = scmp.eq.s32.totalorder %s23, 1
      %p88 = scmp.ne.s32.totalorder %s83, %s85
      %p89 = scmp.eq.s32.totalorder %s23, 0
      %p90 = por %p88, %p89
      %p91 = scmp.ne.s32.totalorder %s83, %s85
      %p92 = scmp.eq.s32.totalorder %s28, 1
      %p93 = por %p91, %p92
      %p94 = scmp.ne.s32.totalorder %s85, %s86
      %p95 = scmp.eq.s32.totalorder %s28, 0
      %p96 = por %p94, %p95
      %p97 = scmp.ne.s32.totalorder %s85, %s86
      %p98 = scmp.eq.s32.totalorder %s29, 1
      %p99 = por %p97, %p98
      %p101 = scmp.ne.s32.totalorder %s86, %s100
      %p102 = scmp.eq.s32.totalorder %s29, 0
      %p103 = por %p101, %p102
      %s105 = sadd.s32 %s104, 1
      %p108 = scmp.eq.s32.totalorder %s23, 1
      %p109 = scmp.ne.s32.totalorder %s104, %s106
      %p110 = scmp.eq.s32.totalorder %s23, 0
      %p111 = por %p109, %p110
      %p112 = scmp.ne.s32.totalorder %s104, %s106
      %p113 = scmp.eq.s32.totalorder %s28, 1
      %p114 = por %p112, %p113
      %p115 = scmp.ne.s32.totalorder %s106, %s107
      %p116 = scmp.eq.s32.totalorder %s28, 0
      %p117 = por %p115, %p116
      %p118 = scmp.ne.s32.totalorder %s106, %s107
      %p119 = scmp.eq.s32.totalorder %s29, 1
      %p120 = por %p118, %p119
      %p122 = scmp.ne.s32.totalorder %s107, %s121
      %p123 = scmp.eq.s32.totalorder %s29, 0
      %p124 = por %p122, %p123
      %s126 = sadd.s32 %s125, 1
      %p129 = scmp.eq.s32.totalorder %s23, 1
      %p130 = scmp.ne.s32.totalorder %s125, %s127
      %p131 = scmp.eq.s32.totalorder %s23, 0
      %p132 = por %p130, %p131
      %p133 = scmp.ne.s32.totalorder %s125, %s127
      %p134 = scmp.eq.s32.totalorder %s28, 1
      %p135 = por %p133, %p134
      %p136 = scmp.ne.s32.totalorder %s127, %s128
      %p137 = scmp.eq.s32.totalorder %s28, 0
      %p138 = por %p136, %p137
      %p139 = scmp.ne.s32.totalorder %s127, %s128
      %p140 = scmp.eq.s32.totalorder %s29, 1
      %p141 = por %p139, %p140
      %p143 = scmp.ne.s32.totalorder %s128, %s142
      %p144 = scmp.eq.s32.totalorder %s29, 0
      %p145 = por %p143, %p144
      %s147 = sadd.s32 %s146, 1
      %p150 = scmp.eq.s32.totalorder %s23, 1
      %p151 = scmp.ne.s32.totalorder %s146, %s148
      %p152 = scmp.eq.s32.totalorder %s23, 0
      %p153 = por %p151, %p152
      %p154 = scmp.ne.s32.totalorder %s146, %s148
      %p155 = scmp.eq.s32.totalorder %s28, 1
      %p156 = por %p154, %p155
      %p157 = scmp.ne.s32.totalorder %s148, %s149
      %p158 = scmp.eq.s32.totalorder %s28, 0
      %p159 = por %p157, %p158
      %p160 = scmp.ne.s32.totalorder %s148, %s149
      %p161 = scmp.eq.s32.totalorder %s29, 1
      %p162 = por %p160, %p161
      %p164 = scmp.ne.s32.totalorder %s149, %s163
      %p165 = scmp.eq.s32.totalorder %s29, 0
      %p166 = por %p164, %p165
      %s168 = sadd.s32 %s167, 1
      %p171 = scmp.eq.s32.totalorder %s23, 1
      %p172 = scmp.ne.s32.totalorder %s167, %s169
      %p173 = scmp.eq.s32.totalorder %s23, 0
      %p174 = por %p172, %p173
      %p175 = scmp.ne.s32.totalorder %s167, %s169
      %p176 = scmp.eq.s32.totalorder %s28, 1
      %p177 = por %p175, %p176
      %p178 = scmp.ne.s32.totalorder %s169, %s170
      %p179 = scmp.eq.s32.totalorder %s28, 0
      %p180 = por %p178, %p179
      %p181 = scmp.ne.s32.totalorder %s169, %s170
      %p182 = scmp.eq.s32.totalorder %s29, 1
      %p183 = por %p181, %p182
      %p185 = scmp.ne.s32.totalorder %s170, %s184
      %p186 = scmp.eq.s32.totalorder %s29, 0
      %p187 = por %p185, %p186
      %s189 = sadd.s32 %s188, 1
      %p192 = scmp.eq.s32.totalorder %s23, 1
      %p193 = scmp.ne.s32.totalorder %s188, %s190
      %p194 = scmp.eq.s32.totalorder %s23, 0
      %p195 = por %p193, %p194
      %p196 = scmp.ne.s32.totalorder %s188, %s190
      %p197 = scmp.eq.s32.totalorder %s28, 1
      %p198 = por %p196, %p197
      %p199 = scmp.ne.s32.totalorder %s190, %s191
      %p200 = scmp.eq.s32.totalorder %s28, 0
      %p201 = por %p199, %p200
      %p202 = scmp.ne.s32.totalorder %s190, %s191
      %p203 = scmp.eq.s32.totalorder %s29, 1
      %p204 = por %p202, %p203
      %p206 = scmp.ne.s32.totalorder %s191, %s205
      %p207 = scmp.eq.s32.totalorder %s29, 0
      %p208 = por %p206, %p207
      %s209 = ssub.s32 %s23, %s30
      %p210 = scmp.eq.s32.totalorder %s209, 0
      %s212 = sadd.s32 %s211, 1
      %s213 = scalar_select %p210, %s211, %s212
      %p216 = pneg %p210
      %p217 = scmp.eq.s32.totalorder %s23, 1
      %p218 = por %p216, %p217
      %p219 = scmp.ne.s32.totalorder %s211, %s214
      %p220 = scmp.eq.s32.totalorder %s23, 0
      %p221 = por %p219, %p220
      %p222 = scmp.ne.s32.totalorder %s211, %s214
      %p223 = scmp.eq.s32.totalorder %s28, 1
      %p224 = por %p222, %p223
      %p225 = scmp.ne.s32.totalorder %s214, %s215
      %p226 = scmp.eq.s32.totalorder %s28, 0
      %p227 = por %p225, %p226
      %p228 = scmp.ne.s32.totalorder %s214, %s215
      %p229 = scmp.eq.s32.totalorder %s29, 1
      %p230 = por %p228, %p229
      %p232 = scmp.ne.s32.totalorder %s215, %s231
      %p233 = scmp.eq.s32.totalorder %s29, 0
      %p234 = por %p232, %p233
      %s235 = ssub.s32 %s23, %s30
      %p236 = scmp.eq.s32.totalorder %s235, 0
      %s238 = sadd.s32 %s237, 1
      %s239 = scalar_select %p236, %s237, %s238
      %p242 = pneg %p236
      %p243 = scmp.eq.s32.totalorder %s23, 1
      %p244 = por %p242, %p243
      %p245 = scmp.ne.s32.totalorder %s237, %s240
      %p246 = scmp.eq.s32.totalorder %s23, 0
      %p247 = por %p245, %p246
      %p248 = scmp.ne.s32.totalorder %s237, %s240
      %p249 = scmp.eq.s32.totalorder %s28, 1
      %p250 = por %p248, %p249
      %p251 = scmp.ne.s32.totalorder %s240, %s241
      %p252 = scmp.eq.s32.totalorder %s28, 0
      %p253 = por %p251, %p252
      %p254 = scmp.ne.s32.totalorder %s240, %s241
      %p255 = scmp.eq.s32.totalorder %s29, 1
      %p256 = por %p254, %p255
      %p258 = scmp.ne.s32.totalorder %s241, %s257
      %p259 = scmp.eq.s32.totalorder %s29, 0
      %p260 = por %p258, %p259
      %p261 = scmp.le.s32.totalorder 1, %s23
      %p262 = scmp.lt.s32.totalorder %s23, 3
      %p263 = pnand %p261, %p262
      %p264 = pneg %p263
      // Predicated region
      $region9: #{tpu_custom_call.1} parent=5 // pred_check
        _
      $region10: #{tpu_custom_call.1} parent=5 // pred_check_branch
        %266 = sbr.rel (%p263) target = $region12
      $region11: #{tpu_custom_call.1} parent=5 // pred_region
        %s267 = ssub.s32 %s23, 1
        // Predicated region
        $region13: #{tpu_custom_call.1} parent=11 // pred_check
          %p268 = pneg %p96
        $region14: #{tpu_custom_call.1} parent=11 // pred_check_branch
          %270 = sbr.rel (%p268) target = $region16
        $region15: #{tpu_custom_call.1} parent=11 // pred_region
          _
        $region16: #{tpu_custom_call.1} parent=11 // pred_fallthru
          _
        // Predicated region
        $region17: #{tpu_custom_call.1} parent=11 // pred_check
          %p271 = pneg %p117
        $region18: #{tpu_custom_call.1} parent=11 // pred_check_branch
          %273 = sbr.rel (%p271) target = $region20
        $region19: #{tpu_custom_call.1} parent=11 // pred_region
          _
        $region20: #{tpu_custom_call.1} parent=11 // pred_fallthru
          _
        // Predicated region
        $region21: #{tpu_custom_call.1} parent=11 // pred_check
          %p274 = pneg %p138
        $region22: #{tpu_custom_call.1} parent=11 // pred_check_branch
          %276 = sbr.rel (%p274) target = $region24
        $region23: #{tpu_custom_call.1} parent=11 // pred_region
          _
        $region24: #{tpu_custom_call.1} parent=11 // pred_fallthru
          _
        // Predicated region
        $region25: #{tpu_custom_call.1} parent=11 // pred_check
          %p277 = pneg %p159
        $region26: #{tpu_custom_call.1} parent=11 // pred_check_branch
          %279 = sbr.rel (%p277) target = $region28
        $region27: #{tpu_custom_call.1} parent=11 // pred_region
          _
        $region28: #{tpu_custom_call.1} parent=11 // pred_fallthru
          _
        // Predicated region
        $region29: #{tpu_custom_call.1} parent=11 // pred_check
          %p280 = pneg %p180
        $region30: #{tpu_custom_call.1} parent=11 // pred_check_branch
          %282 = sbr.rel (%p280) target = $region32
        $region31: #{tpu_custom_call.1} parent=11 // pred_region
          _
        $region32: #{tpu_custom_call.1} parent=11 // pred_fallthru
          _
        // Predicated region
        $region33: #{tpu_custom_call.1} parent=11 // pred_check
          %p283 = pneg %p201
        $region34: #{tpu_custom_call.1} parent=11 // pred_check_branch
          %285 = sbr.rel (%p283) target = $region36
        $region35: #{tpu_custom_call.1} parent=11 // pred_region
          _
        $region36: #{tpu_custom_call.1} parent=11 // pred_fallthru
          _
      $region12: #{tpu_custom_call.1} parent=5 // pred_fallthru
        _
      %p286 = scmp.lt.s32.totalorder %s23, 2
      // Predicated region
      $region37: #{tpu_custom_call.1} parent=5 // pred_check
        %p287 = pneg %p286
      $region38: #{tpu_custom_call.1} parent=5 // pred_check_branch
        %289 = sbr.rel (%p287) target = $region40
      $region39: #{tpu_custom_call.1} parent=5 // pred_region
        // Predicated region
        $region41: #{tpu_custom_call.1} parent=39 // pred_check
          %p290 = pneg %p43
        $region42: #{tpu_custom_call.1} parent=39 // pred_check_branch
          %292 = sbr.rel (%p290) target = $region44
        $region43: #{tpu_custom_call.1} parent=39 // pred_region
          %p293 = scmp.lt.s32.totalorder %s23, 1
          %s294 = scalar_select %p293, %s23, 1
          %s295 = smul.addr %s294, 8
          %s296 = scalar_lea.vmem %s0, %s295
        $region44: #{tpu_custom_call.1} parent=39 // pred_fallthru
          _
        // Predicated region
        $region45: #{tpu_custom_call.1} parent=39 // pred_check
          %p297 = pneg %p69
        $region46: #{tpu_custom_call.1} parent=39 // pred_check_branch
          %299 = sbr.rel (%p297) target = $region48
        $region47: #{tpu_custom_call.1} parent=39 // pred_region
          %p300 = scmp.lt.s32.totalorder %s23, 1
          %s301 = scalar_select %p300, %s23, 1
          %s302 = smul.addr %s301, 8
          %s303 = scalar_lea.vmem %s1, %s302
        $region48: #{tpu_custom_call.1} parent=39 // pred_fallthru
          _
      $region40: #{tpu_custom_call.1} parent=5 // pred_fallthru
        _
      %p304 = scmp.le.s32.totalorder 1, %s23
      %p305 = scmp.lt.s32.totalorder %s23, 3
      %p306 = pnand %p304, %p305
      %p307 = pneg %p306
      // Predicated region
      $region49: #{tpu_custom_call.1} parent=5 // pred_check
        _
      $region50: #{tpu_custom_call.1} parent=5 // pred_check_branch
        %309 = sbr.rel (%p306) target = $region52
      $region51: #{tpu_custom_call.1} parent=5 // pred_region
        %s310 = ssub.s32 %s23, 1
        %p311 = scmp.lt.s32.totalorder %s28, 1
        %s312 = scalar_select %p311, %s28, 1
        %s313 = smul.addr %s312, 8
        %s314 = scalar_lea.vmem %s0, %s313
        %p315 = pneg %p49
        %p316 = pneg %p46
        %p317 = scmp.lt.s32.totalorder %s28, 1
        %s318 = scalar_select %p317, %s28, 1
        %s319 = smul.addr %s318, 8
        %s320 = scalar_lea.vmem %s1, %s319
        %p321 = pneg %p75
        %p322 = pneg %p72
        %p323 = pneg %p96
        %p324 = pneg %p93
        %p325 = pneg %p117
        %p326 = pneg %p114
        %p327 = pneg %p138
        %p328 = pneg %p135
        %p329 = pneg %p159
        %p330 = pneg %p156
        %p331 = pneg %p180
        %p332 = pneg %p177
        %p333 = pneg %p201
        %p334 = pneg %p198
        %p335 = pneg %p227
        %p336 = pneg %p224
        %s337 = sand.u32 %s214, 1
        %s338 = scalar_lea.sflag [#allocation4], %s337
        %s339 = sand.u32 %s214, 1
        %s340 = smul.addr %s339, 8
        %s341 = scalar_lea.vmem [#allocation3], %s340
        %p342 = pneg %p253
        %p343 = pneg %p250
        %s344 = sand.u32 %s240, 1
        %s345 = scalar_lea.sflag [#allocation6], %s344
        %s346 = sand.u32 %s240, 1
        %s347 = smul.addr %s346, 2
        %s348 = scalar_lea.vmem [#allocation5], %s347
        %p349 = scmp.lt.s32.totalorder %s28, 1
        %s350 = scalar_select %p349, %s28, 1
        %s351 = smul.addr %s350, 8
        %s352 = scalar_lea.vmem %s0, %s351
        %p353 = scmp.lt.s32.totalorder %s28, 1
        %s354 = scalar_select %p353, %s28, 1
        %s355 = smul.addr %s354, 8
        %s356 = scalar_lea.vmem %s1, %s355
        %v357 = vld [vmem:[%s352] sm:$0xff]
        %v358 = vld [vmem:[%s356] sm:$0xff]
        %v359 = vld [vmem:[%s2] sm:$0xff]
        %v360 = vld [vmem:[%s2 + $0x8] sm:$0xff]
        %v361 = vld [vmem:[%s2 + $0x10] sm:$0xff]
        %v362 = vld [vmem:[%s2 + $0x18] sm:$0xff]
        %v363 = vld [vmem:[%s2 + $0x20] sm:$0xff]
        %v364 = vld [vmem:[%s2 + $0x28] sm:$0xff]
        %v365 = vld [vmem:[%s2 + $0x30] sm:$0xff]
        %v366 = vld [vmem:[%s2 + $0x38] sm:$0xff]
        %367 = vmatprep.subr.mxu0 0.0
        %368 = vmatpush1.xpose.msra.mxu0 %v359
        %369 = vmatprep.subr.mxu0 0.0
        %370 = vmatpush1.xpose.msra.mxu0 %v360
        %371 = vmatprep.subr.mxu0 0.0
        %372 = vmatpush1.xpose.msra.mxu0 %v361
        %373 = vmatprep.subr.mxu0 0.0
        %374 = vmatpush1.xpose.msra.mxu0 %v362
        %375 = vmatprep.subr.mxu0 0.0
        %376 = vmatpush1.xpose.msra.mxu0 %v363
        %377 = vmatprep.subr.mxu0 0.0
        %378 = vmatpush1.xpose.msra.mxu0 %v364
        %379 = vmatprep.subr.mxu0 0.0
        %380 = vmatpush1.xpose.msra.mxu0 %v365
        %381 = vmatprep.subr.mxu0 0.0
        %382 = vmatpush1.xpose.msra.mxu0 %v366
        %383 = vmatprep.subr.mxu0 0.0
        %384 = vmatpush1.xpose.msra.mxu0 0.0
        %385 = vmatprep.subr.mxu0 0.0
        %386 = vmatpush1.xpose.msra.mxu0 0.0
        %387 = vmatprep.subr.mxu0 0.0
        %388 = vmatpush1.xpose.msra.mxu0 0.0
        %389 = vmatprep.subr.mxu0 0.0
        %390 = vmatpush1.xpose.msra.mxu0 0.0
        %391 = vmatprep.subr.mxu0 0.0
        %392 = vmatpush1.xpose.msra.mxu0 0.0
        %393 = vmatprep.subr.mxu0 0.0
        %394 = vmatpush1.xpose.msra.mxu0 0.0
        %395 = vmatprep.subr.mxu0 0.0
        %396 = vmatpush1.xpose.msra.mxu0 0.0
        %397 = vmatprep.subr.mxu0 0.0
        %398 = vmatpush1.xpose.msra.mxu0 0.0
        %399 = vmatprep.subr.mxu0 0.0
        %400 = vmatpush1.xpose.msra.mxu0 0.0
        %401 = vmatprep.subr.mxu0 0.0
        %402 = vmatpush1.xpose.msra.mxu0 0.0
        %403 = vmatprep.subr.mxu0 0.0
        %404 = vmatpush1.xpose.msra.mxu0 0.0
        %405 = vmatprep.subr.mxu0 0.0
        %406 = vmatpush1.xpose.msra.mxu0 0.0
        %407 = vmatprep.subr.mxu0 0.0
        %408 = vmatpush1.xpose.msra.mxu0 0.0
        %409 = vmatprep.subr.mxu0 0.0
        %410 = vmatpush1.xpose.msra.mxu0 0.0
        %411 = vmatprep.subr.mxu0 0.0
        %412 = vmatpush1.xpose.msra.mxu0 0.0
        %413 = vmatprep.subr.mxu0 0.0
        %414 = vmatpush1.xpose.msra.mxu0 0.0
        %415 = vmatprep.subr.mxu0 0.0
        %416 = vmatpush1.xpose.msra.mxu0 0.0
        %417 = vmatprep.subr.mxu0 0.0
        %418 = vmatpush1.xpose.msra.mxu0 0.0
        %419 = vmatprep.subr.mxu0 0.0
        %420 = vmatpush1.xpose.msra.mxu0 0.0
        %421 = vmatprep.subr.mxu0 0.0
        %422 = vmatpush1.xpose.msra.mxu0 0.0
        %423 = vmatprep.subr.mxu0 0.0
        %424 = vmatpush1.xpose.msra.mxu0 0.0
        %425 = vmatprep.subr.mxu0 0.0
        %426 = vmatpush1.xpose.msra.mxu0 0.0
        %427 = vmatprep.subr.mxu0 0.0
        %428 = vmatpush1.xpose.msra.mxu0 0.0
        %429 = vmatprep.subr.mxu0 0.0
        %430 = vmatpush1.xpose.msra.mxu0 0.0
        %431 = vmatprep.mubr.f32.mxu0 0.0
        %432 = vmatmul.mubr.f32.gmra.mrb[0].mxu0 %v357
        %v433 = vpop.f32.mrb[0].mxu0
        %v434 = vadd.f32 0.0, %v433
        %v435 = vpop.f32.mrb[0].mxu0
        %436 = vmatprep.mubr.f32.mxu0 0.0
        %437 = vmatmul.mubr.f32.gmra.mrb[0].mxu0 %v358
        %v438 = vpop.f32.mrb[0].mxu0
        %v439 = vadd.f32 0.0, %v438
        %v440 = vpop.f32.mrb[0].mxu0
        %441 = vdwg.mxu0
        %vm442 = vcmp.ge.f32.partialorder %v434, 0.0
        %vm443 = vcmp.ge.f32.partialorder %v439, 0.0
        %v444 = vmul.f32 %v434, 0.01
        %v445 = vmul.f32 %v439, 0.01
        %v446 = vsel %vm442, %v434, %v444
        %v447 = vsel %vm443, %v439, %v445
        %vm448 = vcmask 523264
        %v450 = vsel %vm448, %v446, 0
        %v453 = vsel %vm448, %v447, 0
        %455 = vmatprep.subr.mxu0 0.0
        %456 = vmatpush1.msra.mxu0 %v359
        %457 = vmatprep.subr.mxu0 0.0
        %458 = vmatpush1.msra.mxu0 %v360
        %459 = vmatprep.subr.mxu0 0.0
        %460 = vmatpush1.msra.mxu0 %v361
        %461 = vmatprep.subr.mxu0 0.0
        %462 = vmatpush1.msra.mxu0 %v362
        %463 = vmatprep.subr.mxu0 0.0
        %464 = vmatpush1.msra.mxu0 %v363
        %465 = vmatprep.subr.mxu0 0.0
        %466 = vmatpush1.msra.mxu0 %v364
        %467 = vmatprep.subr.mxu0 0.0
        %468 = vmatpush1.msra.mxu0 %v365
        %469 = vmatprep.subr.mxu0 0.0
        %470 = vmatpush1.msra.mxu0 %v366
        %471 = vmatprep.subr.mxu0 0.0
        %472 = vmatpush1.msra.mxu0 0.0
        %473 = vmatprep.subr.mxu0 0.0
        %474 = vmatpush1.msra.mxu0 0.0
        %475 = vmatprep.subr.mxu0 0.0
        %476 = vmatpush1.msra.mxu0 0.0
        %477 = vmatprep.subr.mxu0 0.0
        %478 = vmatpush1.msra.mxu0 0.0
        %479 = vmatprep.subr.mxu0 0.0
        %480 = vmatpush1.msra.mxu0 0.0
        %481 = vmatprep.subr.mxu0 0.0
        %482 = vmatpush1.msra.mxu0 0.0
        %483 = vmatprep.subr.mxu0 0.0
        %484 = vmatpush1.msra.mxu0 0.0
        %485 = vmatprep.subr.mxu0 0.0
        %486 = vmatpush1.msra.mxu0 0.0
        %487 = vmatprep.subr.mxu0 0.0
        %488 = vmatpush1.msra.mxu0 0.0
        %489 = vmatprep.subr.mxu0 0.0
        %490 = vmatpush1.msra.mxu0 0.0
        %491 = vmatprep.subr.mxu0 0.0
        %492 = vmatpush1.msra.mxu0 0.0
        %493 = vmatprep.subr.mxu0 0.0
        %494 = vmatpush1.msra.mxu0 0.0
        %495 = vmatprep.subr.mxu0 0.0
        %496 = vmatpush1.msra.mxu0 0.0
        %497 = vmatprep.subr.mxu0 0.0
        %498 = vmatpush1.msra.mxu0 0.0
        %499 = vmatprep.subr.mxu0 0.0
        %500 = vmatpush1.msra.mxu0 0.0
        %501 = vmatprep.subr.mxu0 0.0
        %502 = vmatpush1.msra.mxu0 0.0
        %503 = vmatprep.subr.mxu0 0.0
        %504 = vmatpush1.msra.mxu0 0.0
        %505 = vmatprep.subr.mxu0 0.0
        %506 = vmatpush1.msra.mxu0 0.0
        %507 = vmatprep.subr.mxu0 0.0
        %508 = vmatpush1.msra.mxu0 0.0
        %509 = vmatprep.subr.mxu0 0.0
        %510 = vmatpush1.msra.mxu0 0.0
        %511 = vmatprep.subr.mxu0 0.0
        %512 = vmatpush1.msra.mxu0 0.0
        %513 = vmatprep.subr.mxu0 0.0
        %514 = vmatpush1.msra.mxu0 0.0
        %515 = vmatprep.subr.mxu0 0.0
        %516 = vmatpush1.msra.mxu0 0.0
        %517 = vmatprep.subr.mxu0 0.0
        %518 = vmatpush1.msra.mxu0 0.0
        %519 = vmatprep.mubr.f32.mxu0 0.0
        %520 = vmatmul.mubr.f32.gmra.mrb[0].mxu0 %v450
        %v521 = vpop.f32.mrb[0].mxu0
        %v522 = vadd.f32 0.0, %v521
        %v523 = vpop.f32.mrb[0].mxu0
        %524 = vmatprep.mubr.f32.mxu0 0.0
        %525 = vmatmul.mubr.f32.gmra.mrb[0].mxu0 %v453
        %v526 = vpop.f32.mrb[0].mxu0
        %v527 = vadd.f32 0.0, %v526
        %v528 = vpop.f32.mrb[0].mxu0
        %529 = vdwg.mxu0
        %vm530 = vcmp.ge.f32.partialorder %v522, 0.0
        %vm531 = vcmp.ge.f32.partialorder %v527, 0.0
        %v532 = vmul.f32 %v522, 0.01
        %v533 = vmul.f32 %v527, 0.01
        %v534 = vsel %vm530, %v522, %v532
        %v535 = vsel %vm531, %v527, %v533
        %536 = vst [vmem:[%s341] sm:$0xff] %v534
        %v537 = vld [vmem:[%s3] sm:$0xff]
        %v538 = vld [vmem:[%s3 + $0x8] sm:$0xff]
        %v539 = vld [vmem:[%s3 + $0x10] sm:$0xff]
        %v540 = vld [vmem:[%s3 + $0x18] sm:$0xff]
        %v541 = vld [vmem:[%s3 + $0x20] sm:$0xff]
        %v542 = vld [vmem:[%s3 + $0x28] sm:$0xff]
        %v543 = vld [vmem:[%s3 + $0x30] sm:$0xff]
        %v544 = vld [vmem:[%s3 + $0x38] sm:$0xff]
        %v545 = vld [vmem:[%s3 + $0x40] sm:$0xff]
        %v546 = vld [vmem:[%s3 + $0x48] sm:$0xff]
        %v547 = vld [vmem:[%s3 + $0x50] sm:$0xff]
        %v548 = vld [vmem:[%s3 + $0x58] sm:$0xff]
        %v549 = vld [vmem:[%s3 + $0x60] sm:$0xff]
        %v550 = vld [vmem:[%s3 + $0x68] sm:$0xff]
        %v551 = vld [vmem:[%s3 + $0x70] sm:$0xff]
        %v552 = vld [vmem:[%s3 + $0x78] sm:$0xff]
        %553 = vmatprep.subr.mxu0 0.0
        %554 = vmatpush1.msra.mxu0 %v537
        %555 = vmatprep.subr.mxu0 0.0
        %556 = vmatpush1.msra.mxu0 %v538
        %557 = vmatprep.subr.mxu0 0.0
        %558 = vmatpush1.msra.mxu0 %v539
        %559 = vmatprep.subr.mxu0 0.0
        %560 = vmatpush1.msra.mxu0 %v540
        %561 = vmatprep.subr.mxu0 0.0
        %562 = vmatpush1.msra.mxu0 %v541
        %563 = vmatprep.subr.mxu0 0.0
        %564 = vmatpush1.msra.mxu0 %v542
        %565 = vmatprep.subr.mxu0 0.0
        %566 = vmatpush1.msra.mxu0 %v543
        %567 = vmatprep.subr.mxu0 0.0
        %568 = vmatpush1.msra.mxu0 %v544
        %569 = vmatprep.subr.mxu0 0.0
        %570 = vmatpush1.msra.mxu0 %v545
        %571 = vmatprep.subr.mxu0 0.0
        %572 = vmatpush1.msra.mxu0 %v546
        %573 = vmatprep.subr.mxu0 0.0
        %574 = vmatpush1.msra.mxu0 %v547
        %575 = vmatprep.subr.mxu0 0.0
        %576 = vmatpush1.msra.mxu0 %v548
        %577 = vmatprep.subr.mxu0 0.0
        %578 = vmatpush1.msra.mxu0 %v549
        %579 = vmatprep.subr.mxu0 0.0
        %580 = vmatpush1.msra.mxu0 %v550
        %581 = vmatprep.subr.mxu0 0.0
        %582 = vmatpush1.msra.mxu0 %v551
        %583 = vmatprep.subr.mxu0 0.0
        %584 = vmatpush1.msra.mxu0 %v552
        %585 = vmatprep.subr.mxu0 0.0
        %586 = vmatpush1.msra.mxu0 0.0
        %587 = vmatprep.subr.mxu0 0.0
        %588 = vmatpush1.msra.mxu0 0.0
        %589 = vmatprep.subr.mxu0 0.0
        %590 = vmatpush1.msra.mxu0 0.0
        %591 = vmatprep.subr.mxu0 0.0
        %592 = vmatpush1.msra.mxu0 0.0
        %593 = vmatprep.subr.mxu0 0.0
        %594 = vmatpush1.msra.mxu0 0.0
        %595 = vmatprep.subr.mxu0 0.0
        %596 = vmatpush1.msra.mxu0 0.0
        %597 = vmatprep.subr.mxu0 0.0
        %598 = vmatpush1.msra.mxu0 0.0
        %599 = vmatprep.subr.mxu0 0.0
        %600 = vmatpush1.msra.mxu0 0.0
        %601 = vmatprep.subr.mxu0 0.0
        %602 = vmatpush1.msra.mxu0 0.0
        %603 = vmatprep.subr.mxu0 0.0
        %604 = vmatpush1.msra.mxu0 0.0
        %605 = vmatprep.subr.mxu0 0.0
        %606 = vmatpush1.msra.mxu0 0.0
        %607 = vmatprep.subr.mxu0 0.0
        %608 = vmatpush1.msra.mxu0 0.0
        %609 = vmatprep.subr.mxu0 0.0
        %610 = vmatpush1.msra.mxu0 0.0
        %611 = vmatprep.subr.mxu0 0.0
        %612 = vmatpush1.msra.mxu0 0.0
        %613 = vmatprep.subr.mxu0 0.0
        %614 = vmatpush1.msra.mxu0 0.0
        %615 = vmatprep.subr.mxu0 0.0
        %616 = vmatpush1.msra.mxu0 0.0
        %617 = vmatprep.mubr.f32.mxu0 0.0
        %618 = vmatmul.mubr.f32.gmra.mrb[0].mxu0 %v534
        %v619 = vpop.f32.mrb[0].mxu0
        %v620 = vadd.f32 0.0, %v619
        %v621 = vpop.f32.mrb[0].mxu0
        %622 = vdwg.mxu0
        %v623 = vxor.u32 %v620, 2147483648
        %v624 = vmul.f32 %v623, 1.442695
        %v625 = vpow.pop %v624
        %v626 = vadd.f32 %v625, 1.0
        %v627 = vrcp.pop %v626
        %v628 = vmul.f32 1.0, %v627
        %v629 = vld [vmem:[%s6] sm:$0xff]
        %vm630 = vcmask 64512
        %v632 = vsel %vm630, %v629, 0
        %634 = vmatprep.subr.mxu0 0.0
        %635 = vmatpush1.msra.mxu0 %v628
        %636 = vmatprep.subr.mxu0 0.0
        %637 = vmatpush1.msra.mxu0 0.0
        %638 = vmatprep.subr.mxu0 0.0
        %639 = vmatpush1.msra.mxu0 0.0
        %640 = vmatprep.subr.mxu0 0.0
        %641 = vmatpush1.msra.mxu0 0.0
        %642 = vmatprep.subr.mxu0 0.0
        %643 = vmatpush1.msra.mxu0 0.0
        %644 = vmatprep.subr.mxu0 0.0
        %645 = vmatpush1.msra.mxu0 0.0
        %646 = vmatprep.subr.mxu0 0.0
        %647 = vmatpush1.msra.mxu0 0.0
        %648 = vmatprep.subr.mxu0 0.0
        %649 = vmatpush1.msra.mxu0 0.0
        %650 = vmatprep.subr.mxu0 0.0
        %651 = vmatpush1.msra.mxu0 0.0
        %652 = vmatprep.subr.mxu0 0.0
        %653 = vmatpush1.msra.mxu0 0.0
        %654 = vmatprep.subr.mxu0 0.0
        %655 = vmatpush1.msra.mxu0 0.0
        %656 = vmatprep.subr.mxu0 0.0
        %657 = vmatpush1.msra.mxu0 0.0
        %658 = vmatprep.subr.mxu0 0.0
        %659 = vmatpush1.msra.mxu0 0.0
        %660 = vmatprep.subr.mxu0 0.0
        %661 = vmatpush1.msra.mxu0 0.0
        %662 = vmatprep.subr.mxu0 0.0
        %663 = vmatpush1.msra.mxu0 0.0
        %664 = vmatprep.subr.mxu0 0.0
        %665 = vmatpush1.msra.mxu0 0.0
        %666 = vmatprep.subr.mxu0 0.0
        %667 = vmatpush1.msra.mxu0 0.0
        %668 = vmatprep.subr.mxu0 0.0
        %669 = vmatpush1.msra.mxu0 0.0
        %670 = vmatprep.subr.mxu0 0.0
        %671 = vmatpush1.msra.mxu0 0.0
        %672 = vmatprep.subr.mxu0 0.0
        %673 = vmatpush1.msra.mxu0 0.0
        %674 = vmatprep.subr.mxu0 0.0
        %675 = vmatpush1.msra.mxu0 0.0
        %676 = vmatprep.subr.mxu0 0.0
        %677 = vmatpush1.msra.mxu0 0.0
        %678 = vmatprep.subr.mxu0 0.0
        %679 = vmatpush1.msra.mxu0 0.0
        %680 = vmatprep.subr.mxu0 0.0
        %681 = vmatpush1.msra.mxu0 0.0
        %682 = vmatprep.subr.mxu0 0.0
        %683 = vmatpush1.msra.mxu0 0.0
        %684 = vmatprep.subr.mxu0 0.0
        %685 = vmatpush1.msra.mxu0 0.0
        %686 = vmatprep.subr.mxu0 0.0
        %687 = vmatpush1.msra.mxu0 0.0
        %688 = vmatprep.subr.mxu0 0.0
        %689 = vmatpush1.msra.mxu0 0.0
        %690 = vmatprep.subr.mxu0 0.0
        %691 = vmatpush1.msra.mxu0 0.0
        %692 = vmatprep.subr.mxu0 0.0
        %693 = vmatpush1.msra.mxu0 0.0
        %694 = vmatprep.subr.mxu0 0.0
        %695 = vmatpush1.msra.mxu0 0.0
        %696 = vmatprep.subr.mxu0 0.0
        %697 = vmatpush1.msra.mxu0 0.0
        %698 = vmatprep.mubr.f32.mxu0 0.0
        %699 = vmatmul.mubr.f32.gmra.mrb[0].mxu0 %v632
        %v700 = vpop.f32.mrb[0].mxu0
        %v701 = vadd.f32 0.0, %v700
        %v702 = vpop.f32.mrb[0].mxu0
        %703 = vdwg.mxu0
        %v704 = vld [vmem:[%s4] sm:$0xff]
        %v705 = vld [vmem:[%s4 + $0x8] sm:$0xff]
        %vm706 = vcmask 130048
        %v708 = vsel %vm706, %v701, 0
        %710 = vmatprep.subr.mxu0 0.0
        %711 = vmatpush1.msra.mxu0 %v704
        %712 = vmatprep.subr.mxu0 0.0
        %713 = vmatpush1.msra.mxu0 %v705
        %714 = vmatprep.subr.mxu0 0.0
        %715 = vmatpush1.msra.mxu0 0.0
        %716 = vmatprep.subr.mxu0 0.0
        %717 = vmatpush1.msra.mxu0 0.0
        %718 = vmatprep.subr.mxu0 0.0
        %719 = vmatpush1.msra.mxu0 0.0
        %720 = vmatprep.subr.mxu0 0.0
        %721 = vmatpush1.msra.mxu0 0.0
        %722 = vmatprep.subr.mxu0 0.0
        %723 = vmatpush1.msra.mxu0 0.0
        %724 = vmatprep.subr.mxu0 0.0
        %725 = vmatpush1.msra.mxu0 0.0
        %726 = vmatprep.subr.mxu0 0.0
        %727 = vmatpush1.msra.mxu0 0.0
        %728 = vmatprep.subr.mxu0 0.0
        %729 = vmatpush1.msra.mxu0 0.0
        %730 = vmatprep.subr.mxu0 0.0
        %731 = vmatpush1.msra.mxu0 0.0
        %732 = vmatprep.subr.mxu0 0.0
        %733 = vmatpush1.msra.mxu0 0.0
        %734 = vmatprep.subr.mxu0 0.0
        %735 = vmatpush1.msra.mxu0 0.0
        %736 = vmatprep.subr.mxu0 0.0
        %737 = vmatpush1.msra.mxu0 0.0
        %738 = vmatprep.subr.mxu0 0.0
        %739 = vmatpush1.msra.mxu0 0.0
        %740 = vmatprep.subr.mxu0 0.0
        %741 = vmatpush1.msra.mxu0 0.0
        %742 = vmatprep.subr.mxu0 0.0
        %743 = vmatpush1.msra.mxu0 0.0
        %744 = vmatprep.subr.mxu0 0.0
        %745 = vmatpush1.msra.mxu0 0.0
        %746 = vmatprep.subr.mxu0 0.0
        %747 = vmatpush1.msra.mxu0 0.0
        %748 = vmatprep.subr.mxu0 0.0
        %749 = vmatpush1.msra.mxu0 0.0
        %750 = vmatprep.subr.mxu0 0.0
        %751 = vmatpush1.msra.mxu0 0.0
        %752 = vmatprep.subr.mxu0 0.0
        %753 = vmatpush1.msra.mxu0 0.0
        %754 = vmatprep.subr.mxu0 0.0
        %755 = vmatpush1.msra.mxu0 0.0
        %756 = vmatprep.subr.mxu0 0.0
        %757 = vmatpush1.msra.mxu0 0.0
        %758 = vmatprep.subr.mxu0 0.0
        %759 = vmatpush1.msra.mxu0 0.0
        %760 = vmatprep.subr.mxu0 0.0
        %761 = vmatpush1.msra.mxu0 0.0
        %762 = vmatprep.subr.mxu0 0.0
        %763 = vmatpush1.msra.mxu0 0.0
        %764 = vmatprep.subr.mxu0 0.0
        %765 = vmatpush1.msra.mxu0 0.0
        %766 = vmatprep.subr.mxu0 0.0
        %767 = vmatpush1.msra.mxu0 0.0
        %768 = vmatprep.subr.mxu0 0.0
        %769 = vmatpush1.msra.mxu0 0.0
        %770 = vmatprep.subr.mxu0 0.0
        %771 = vmatpush1.msra.mxu0 0.0
        %772 = vmatprep.subr.mxu0 0.0
        %773 = vmatpush1.msra.mxu0 0.0
        %774 = vmatprep.mubr.f32.mxu0 0.0
        %775 = vmatmul.mubr.f32.gmra.mrb[0].mxu0 %v708
        %v776 = vpop.f32.mrb[0].mxu0
        %v777 = vadd.f32 0.0, %v776
        %v778 = vpop.f32.mrb[0].mxu0
        %779 = vdwg.mxu0
        %v780 = vmul.f32 %v534, %v777
        %v781 = vld [vmem:[%s5] sm:$0xff]
        %v782 = vld [vmem:[%s5 + $0x8] sm:$0xff]
        %v783 = vld [vmem:[%s5 + $0x10] sm:$0xff]
        %v784 = vld [vmem:[%s5 + $0x18] sm:$0xff]
        %v785 = vld [vmem:[%s5 + $0x20] sm:$0xff]
        %v786 = vld [vmem:[%s5 + $0x28] sm:$0xff]
        %v787 = vld [vmem:[%s5 + $0x30] sm:$0xff]
        %v788 = vld [vmem:[%s5 + $0x38] sm:$0xff]
        %v789 = vld [vmem:[%s5 + $0x40] sm:$0xff]
        %v790 = vld [vmem:[%s5 + $0x48] sm:$0xff]
        %v791 = vld [vmem:[%s5 + $0x50] sm:$0xff]
        %v792 = vld [vmem:[%s5 + $0x58] sm:$0xff]
        %v793 = vld [vmem:[%s5 + $0x60] sm:$0xff]
        %v794 = vld [vmem:[%s5 + $0x68] sm:$0xff]
        %v795 = vld [vmem:[%s5 + $0x70] sm:$0xff]
        %v796 = vld [vmem:[%s5 + $0x78] sm:$0xff]
        %797 = vmatprep.subr.mxu0 0.0
        %798 = vmatpush1.msra.mxu0 %v781
        %799 = vmatprep.subr.mxu0 0.0
        %800 = vmatpush1.msra.mxu0 %v782
        %801 = vmatprep.subr.mxu0 0.0
        %802 = vmatpush1.msra.mxu0 %v783
        %803 = vmatprep.subr.mxu0 0.0
        %804 = vmatpush1.msra.mxu0 %v784
        %805 = vmatprep.subr.mxu0 0.0
        %806 = vmatpush1.msra.mxu0 %v785
        %807 = vmatprep.subr.mxu0 0.0
        %808 = vmatpush1.msra.mxu0 %v786
        %809 = vmatprep.subr.mxu0 0.0
        %810 = vmatpush1.msra.mxu0 %v787
        %811 = vmatprep.subr.mxu0 0.0
        %812 = vmatpush1.msra.mxu0 %v788
        %813 = vmatprep.subr.mxu0 0.0
        %814 = vmatpush1.msra.mxu0 %v789
        %815 = vmatprep.subr.mxu0 0.0
        %816 = vmatpush1.msra.mxu0 %v790
        %817 = vmatprep.subr.mxu0 0.0
        %818 = vmatpush1.msra.mxu0 %v791
        %819 = vmatprep.subr.mxu0 0.0
        %820 = vmatpush1.msra.mxu0 %v792
        %821 = vmatprep.subr.mxu0 0.0
        %822 = vmatpush1.msra.mxu0 %v793
        %823 = vmatprep.subr.mxu0 0.0
        %824 = vmatpush1.msra.mxu0 %v794
        %825 = vmatprep.subr.mxu0 0.0
        %826 = vmatpush1.msra.mxu0 %v795
        %827 = vmatprep.subr.mxu0 0.0
        %828 = vmatpush1.msra.mxu0 %v796
        %829 = vmatprep.subr.mxu0 0.0
        %830 = vmatpush1.msra.mxu0 0.0
        %831 = vmatprep.subr.mxu0 0.0
        %832 = vmatpush1.msra.mxu0 0.0
        %833 = vmatprep.subr.mxu0 0.0
        %834 = vmatpush1.msra.mxu0 0.0
        %835 = vmatprep.subr.mxu0 0.0
        %836 = vmatpush1.msra.mxu0 0.0
        %837 = vmatprep.subr.mxu0 0.0
        %838 = vmatpush1.msra.mxu0 0.0
        %839 = vmatprep.subr.mxu0 0.0
        %840 = vmatpush1.msra.mxu0 0.0
        %841 = vmatprep.subr.mxu0 0.0
        %842 = vmatpush1.msra.mxu0 0.0
        %843 = vmatprep.subr.mxu0 0.0
        %844 = vmatpush1.msra.mxu0 0.0
        %845 = vmatprep.subr.mxu0 0.0
        %846 = vmatpush1.msra.mxu0 0.0
        %847 = vmatprep.subr.mxu0 0.0
        %848 = vmatpush1.msra.mxu0 0.0
        %849 = vmatprep.subr.mxu0 0.0
        %850 = vmatpush1.msra.mxu0 0.0
        %851 = vmatprep.subr.mxu0 0.0
        %852 = vmatpush1.msra.mxu0 0.0
        %853 = vmatprep.subr.mxu0 0.0
        %854 = vmatpush1.msra.mxu0 0.0
        %855 = vmatprep.subr.mxu0 0.0
        %856 = vmatpush1.msra.mxu0 0.0
        %857 = vmatprep.subr.mxu0 0.0
        %858 = vmatpush1.msra.mxu0 0.0
        %859 = vmatprep.subr.mxu0 0.0
        %860 = vmatpush1.msra.mxu0 0.0
        %861 = vmatprep.mubr.f32.mxu0 0.0
        %862 = vmatmul.mubr.f32.gmra.mrb[0].mxu0 %v780
        %v863 = vpop.f32.mrb[0].mxu0
        %v864 = vadd.f32 0.0, %v863
        %v865 = vpop.f32.mrb[0].mxu0
        %866 = vdwg.mxu0
        %v867 = vmul.f32 %v535, %v777
        %868 = vmatprep.subr.mxu0 0.0
        %869 = vmatpush1.msra.mxu0 %v781
        %870 = vmatprep.subr.mxu0 0.0
        %871 = vmatpush1.msra.mxu0 %v782
        %872 = vmatprep.subr.mxu0 0.0
        %873 = vmatpush1.msra.mxu0 %v783
        %874 = vmatprep.subr.mxu0 0.0
        %875 = vmatpush1.msra.mxu0 %v784
        %876 = vmatprep.subr.mxu0 0.0
        %877 = vmatpush1.msra.mxu0 %v785
        %878 = vmatprep.subr.mxu0 0.0
        %879 = vmatpush1.msra.mxu0 %v786
        %880 = vmatprep.subr.mxu0 0.0
        %881 = vmatpush1.msra.mxu0 %v787
        %882 = vmatprep.subr.mxu0 0.0
        %883 = vmatpush1.msra.mxu0 %v788
        %884 = vmatprep.subr.mxu0 0.0
        %885 = vmatpush1.msra.mxu0 %v789
        %886 = vmatprep.subr.mxu0 0.0
        %887 = vmatpush1.msra.mxu0 %v790
        %888 = vmatprep.subr.mxu0 0.0
        %889 = vmatpush1.msra.mxu0 %v791
        %890 = vmatprep.subr.mxu0 0.0
        %891 = vmatpush1.msra.mxu0 %v792
        %892 = vmatprep.subr.mxu0 0.0
        %893 = vmatpush1.msra.mxu0 %v793
        %894 = vmatprep.subr.mxu0 0.0
        %895 = vmatpush1.msra.mxu0 %v794
        %896 = vmatprep.subr.mxu0 0.0
        %897 = vmatpush1.msra.mxu0 %v795
        %898 = vmatprep.subr.mxu0 0.0
        %899 = vmatpush1.msra.mxu0 %v796
        %900 = vmatprep.subr.mxu0 0.0
        %901 = vmatpush1.msra.mxu0 0.0
        %902 = vmatprep.subr.mxu0 0.0
        %903 = vmatpush1.msra.mxu0 0.0
        %904 = vmatprep.subr.mxu0 0.0
        %905 = vmatpush1.msra.mxu0 0.0
        %906 = vmatprep.subr.mxu0 0.0
        %907 = vmatpush1.msra.mxu0 0.0
        %908 = vmatprep.subr.mxu0 0.0
        %909 = vmatpush1.msra.mxu0 0.0
        %910 = vmatprep.subr.mxu0 0.0
        %911 = vmatpush1.msra.mxu0 0.0
        %912 = vmatprep.subr.mxu0 0.0
        %913 = vmatpush1.msra.mxu0 0.0
        %914 = vmatprep.subr.mxu0 0.0
        %915 = vmatpush1.msra.mxu0 0.0
        %916 = vmatprep.subr.mxu0 0.0
        %917 = vmatpush1.msra.mxu0 0.0
        %918 = vmatprep.subr.mxu0 0.0
        %919 = vmatpush1.msra.mxu0 0.0
        %920 = vmatprep.subr.mxu0 0.0
        %921 = vmatpush1.msra.mxu0 0.0
        %922 = vmatprep.subr.mxu0 0.0
        %923 = vmatpush1.msra.mxu0 0.0
        %924 = vmatprep.subr.mxu0 0.0
        %925 = vmatpush1.msra.mxu0 0.0
        %926 = vmatprep.subr.mxu0 0.0
        %927 = vmatpush1.msra.mxu0 0.0
        %928 = vmatprep.subr.mxu0 0.0
        %929 = vmatpush1.msra.mxu0 0.0
        %930 = vmatprep.subr.mxu0 0.0
        %931 = vmatpush1.msra.mxu0 0.0
        %932 = vmatprep.mubr.f32.mxu0 0.0
        %933 = vmatmul.mubr.f32.gmra.mrb[0].mxu0 %v867
        %v934 = vpop.f32.mrb[0].mxu0
        %v935 = vadd.f32 0.0, %v934
        %v936 = vpop.f32.mrb[0].mxu0
        %937 = vdwg.mxu0
        %s938 = sld [smem:[#allocation2]]
        %vm939 = vcmask 261120
        %v940 = vsel %vm939, %v864, 0.0
        %v941 = vrot.slane %v940, 4
        %v942 = vadd.f32 %v940, %v941
        %v943 = vrot.slane %v942, 2
        %v944 = vadd.f32 %v942, %v943
        %v945 = vrot.slane %v944, 1
        %v946 = vadd.f32 %v944, %v945
        %v947 = vstv %s938
        %v948 = vadd.f32 %v946, %v947
        %v949 = vsel %vm939, %v935, 0.0
        %v950 = vrot.slane %v949, 4
        %v951 = vadd.f32 %v949, %v950
        %v952 = vrot.slane %v951, 2
        %v953 = vadd.f32 %v951, %v952
        %v954 = vrot.slane %v953, 1
        %v955 = vadd.f32 %v953, %v954
        %v956 = vadd.f32 %v955, %v947
        %vm957 = vcmask 1040384
        %v958 = vsel %vm957, %v948, %v956
        %vm959 = vcmask 254976
        %960 = vst.msk [vmem:[%s348] sm:$0x3] %vm959, %v958
        %s961 = sand.u32 %s214, 1
        %s962 = scalar_lea.sflag [#allocation4], %s961
        %s963 = sand.u32 %s214, 1
        %s964 = smul.addr %s963, 8
        %s965 = scalar_lea.vmem [#allocation3], %s964
        %s966 = sand.u32 %s240, 1
        %s967 = scalar_lea.sflag [#allocation6], %s966
        %s968 = sand.u32 %s240, 1
        %s969 = smul.addr %s968, 2
        %s970 = scalar_lea.vmem [#allocation5], %s969
        // Predicated region
        $region53: #{tpu_custom_call.1} parent=51 // pred_check
          %p971 = pneg %p224
        $region54: #{tpu_custom_call.1} parent=51 // pred_check_branch
          %973 = sbr.rel (%p971) target = $region56
        $region55: #{tpu_custom_call.1} parent=51 // pred_region
          %s975 = ssub.s32 128, 128
          %976 = vsyncadd %s962, %s975
          %s977 = smul.addr %s28, 128
          %s978 = scalar_lea.hbm %s8, %s977
          %s980 = sshll.u32 %s965, 4
          %s981 = int_to_ptr.vmem [resolvable:$true] %s980
          %983 = dma.vmem_to_hbm [thread:$0]  %s981, 128, %s978, %s962
        $region56: #{tpu_custom_call.1} parent=51 // pred_fallthru
          _
        // Predicated region
        $region57: #{tpu_custom_call.1} parent=51 // pred_check
          %p984 = pneg %p250
        $region58: #{tpu_custom_call.1} parent=51 // pred_check_branch
          %986 = sbr.rel (%p984) target = $region60
        $region59: #{tpu_custom_call.1} parent=51 // pred_region
          %s988 = ssub.s32 32, 32
          %989 = vsyncadd %s967, %s988
          %s990 = smul.addr %s28, 32
          %s991 = scalar_lea.hbm %s9, %s990
          %s993 = sshll.u32 %s970, 4
          %s994 = int_to_ptr.vmem [resolvable:$true] %s993
          %996 = dma.vmem_to_hbm [thread:$0]  %s994, 32, %s991, %s967
        $region60: #{tpu_custom_call.1} parent=51 // pred_fallthru
          _
      $region52: #{tpu_custom_call.1} parent=5 // pred_fallthru
        _
      %p997 = scmp.le.s32.totalorder 2, %s23
      // Predicated region
      $region61: #{tpu_custom_call.1} parent=5 // pred_check
        %p998 = pneg %p997
      $region62: #{tpu_custom_call.1} parent=5 // pred_check_branch
        %1000 = sbr.rel (%p998) target = $region64
      $region63: #{tpu_custom_call.1} parent=5 // pred_region
        %s1001 = ssub.s32 %s23, 2
        // Predicated region
        $region65: #{tpu_custom_call.1} parent=63 // pred_check
          %p1002 = pneg %p230
        $region66: #{tpu_custom_call.1} parent=63 // pred_check_branch
          %1004 = sbr.rel (%p1002) target = $region68
        $region67: #{tpu_custom_call.1} parent=63 // pred_region
          %s1005 = sand.u32 %s215, 1
          %s1006 = scalar_lea.sflag [#allocation4], %s1005
          %s1007 = sand.u32 %s215, 1
          %s1008 = smul.addr %s1007, 8
          %s1009 = scalar_lea.vmem [#allocation3], %s1008
          %1010 = dma.done %s1006, 128
        $region68: #{tpu_custom_call.1} parent=63 // pred_fallthru
          _
        // Predicated region
        $region69: #{tpu_custom_call.1} parent=63 // pred_check
          %p1011 = pneg %p256
        $region70: #{tpu_custom_call.1} parent=63 // pred_check_branch
          %1013 = sbr.rel (%p1011) target = $region72
        $region71: #{tpu_custom_call.1} parent=63 // pred_region
          %s1014 = sand.u32 %s241, 1
          %s1015 = scalar_lea.sflag [#allocation6], %s1014
          %s1016 = sand.u32 %s241, 1
          %s1017 = smul.addr %s1016, 2
          %s1018 = scalar_lea.vmem [#allocation5], %s1017
          %1019 = dma.done %s1015, 32
        $region72: #{tpu_custom_call.1} parent=63 // pred_fallthru
          _
      $region64: #{tpu_custom_call.1} parent=5 // pred_fallthru
        _
    $region6: #{tpu_custom_call.1} parent=1 // loop_footer
      %s27 = sadd.s32 1, %s23
    $region7: #{tpu_custom_call.1} parent=1 // loop_footer_branch
      %22 = sbr.rel target = $region3
    $region8: #{tpu_custom_call.1} parent=1 // loop_exit
      _
    %1020 = vsyncpa [#allocation4], 1
    %s1021 = scalar_lea.sflag [#allocation4], 1
    %1022 = vsyncpa %s1021, 1
    %1023 = vsyncpa [#allocation6], 1
    %s1024 = scalar_lea.sflag [#allocation6], 1
    %1025 = vsyncpa %s1024, 1

</llo_original>
